<compile_context>
chip_gen: v6e
topology: v6e:2x2x1
jax: 0.10.0
libtpu: 0.0.40
codegen_flags: <defaults>
</compile_context>

<pallas_src>
import functools
import math

import jax
import jax.numpy as jnp
from jax.experimental import pallas as pl
from jax.experimental.pallas import tpu as pltpu

LN_EPS = 1e-12                       # BERT LayerNorm eps
VMEM_LIMIT_BYTES = 48 * 1024 * 1024  # above 16/32 MiB scoped defaults, below v7x 64 MiB physical
NEG_INF = -1e30                      # finite "minus infinity" bias for padded vocab columns


# ----------------------------- small helpers -----------------------------

def _round_up(n, m):
    return ((n + m - 1) // m) * m


def _dot_nt(a, b):
    """a @ b.T without emitting a transpose: contract dim 1 of both operands.

    b is a PyTorch-layout [out, in] weight; operands should be bf16, accumulation is f32.
    """
    return jax.lax.dot_general(a, b, dimension_numbers=(((1,), (1,)), ((), ())),
                               preferred_element_type=jnp.float32)


def _ln(x, g, b):
    # f32 statistics (v5e VPU/EUP have no bf16).
    mu = jnp.mean(x, axis=-1, keepdims=True)
    var = jnp.mean((x - mu) ** 2, axis=-1, keepdims=True)
    return (x - mu) * jax.lax.rsqrt(var + LN_EPS) * g + b


def _gelu(x):
    # TODO(synk): HF BERT default act is exact erf-GELU; tanh approximation kept for
    # guaranteed Mosaic lowering (difference ~1e-3 per activation).
    c = 0.7978845608028654  # sqrt(2/pi)
    return 0.5 * x * (1.0 + jnp.tanh(c * (x + 0.044715 * x * x * x)))


def _pick_row_tile(n, cap=256):
    """Largest divisor of n that is <= cap and a sublane multiple (or n itself)."""
    for t in range(min(n, cap), 0, -1):
        if n % t == 0 and (t % 8 == 0 or t == n):
            return t
    return n


def _pick_lane_tile(n, cap=512):
    """Largest lane-dense (multiple-of-128) divisor of n that is <= cap, else n (full dim)."""
    for t in range(min(n, cap), 0, -1):
        if n % t == 0 and t % 128 == 0:
            return t
    return n


def _rep_spec(a):
    """Replicated (grid-invariant) BlockSpec: full array, constant block index."""
    nd = a.ndim
    return pl.BlockSpec(a.shape, lambda b, _nd=nd: (0,) * _nd)


# ------------------------------- LayerNorm -------------------------------

def layernorm_kernel(x_ref, g_ref, b_ref, o_ref):
    o_ref[...] = _ln(x_ref[...], g_ref[...], b_ref[...]).astype(o_ref.dtype)


def layernorm_bf16(x2d, g, b):
    """Row-tiled LayerNorm; f32 in, bf16 out (feeds the bf16 transformer layers)."""
    N, H = x2d.shape
    tr = _pick_row_tile(N, cap=1024)     # mem-bound: big tiles for HBM roofline
    return pl.pallas_call(
        layernorm_kernel,
        out_shape=jax.ShapeDtypeStruct((N, H), jnp.bfloat16),
        grid=(N // tr,),
        in_specs=[pl.BlockSpec((tr, H), lambda i: (i, 0)),
                  pl.BlockSpec((1, H), lambda i: (0, 0)),
                  pl.BlockSpec((1, H), lambda i: (0, 0))],
        out_specs=pl.BlockSpec((tr, H), lambda i: (i, 0)),
        compiler_params=pltpu.CompilerParams(
            dimension_semantics=("parallel",),
            vmem_limit_bytes=VMEM_LIMIT_BYTES),
    )(x2d, g, b)


# ------------------------------ attention block ------------------------------

def attention_kernel(x_ref, amask_ref,
                     wq_ref, bq_ref, wk_ref, bk_ref, wv_ref, bv_ref,
                     wo3_ref, bo_ref, ln1g_ref, ln1b_ref,
                     o_ref, *, num_heads):
    x = x_ref[0]                      # [S, H] bf16
    S, H = x.shape
    dH = H // num_heads
    scale = 1.0 / math.sqrt(dH)
    amask = amask_ref[0]              # [1, S] f32 additive mask (broadcast over query rows)

    # Full-width QKV projections (best MXU utilization): bf16 operands, f32 accumulation.
    q = (_dot_nt(x, wq_ref[...]) + bq_ref[...]).astype(jnp.bfloat16)
    k = (_dot_nt(x, wk_ref[...]) + bk_ref[...]).astype(jnp.bfloat16)
    v = (_dot_nt(x, wv_ref[...]) + bv_ref[...]).astype(jnp.bfloat16)

    # TODO(synk): replace the static head loop + lane slices with a single head-batched
    # [nh,S,dH] dot_general (pltpu.einshape relayout) once verified to lower at these shapes.
    attn_out = jnp.zeros((S, H), jnp.float32)
    for h in range(num_heads):
        sl = slice(h * dH, (h + 1) * dH)
        s = _dot_nt(q[:, sl], k[:, sl]) * scale + amask            # [S, S] f32
        s = s - jnp.max(s, axis=-1, keepdims=True)
        p = jnp.exp(s)
        p = p * pl.reciprocal(jnp.sum(p, axis=-1, keepdims=True), approx=True)
        ctx = jnp.dot(p.astype(jnp.bfloat16), v[:, sl],
                      preferred_element_type=jnp.float32)           # [S, dH] f32
        # Head merge folded into the output projection: no [S,H] ctx scratch / masked stores.
        attn_out = attn_out + _dot_nt(ctx.astype(jnp.bfloat16), wo3_ref[h])   # [S, H] f32

    attn_out = attn_out + bo_ref[...]
    o_ref[0] = _ln(x.astype(jnp.float32) + attn_out,
                   ln1g_ref[...], ln1b_ref[...]).astype(jnp.bfloat16)


def bert_attention(x, amask, lp, num_heads):
    B, S, H = x.shape
    weights = [lp["wq"], lp["bq"], lp["wk"], lp["bk"], lp["wv"], lp["bv"],
               lp["wo3"], lp["bo"], lp["ln1_g"], lp["ln1_b"]]
    # Constant-index weight blocks stay resident across the (parallel) batch grid.
    # TODO(synk): pipeline_mode=pl.Buffered(1) on these specs to drop the second weight buffer.
    in_specs = ([pl.BlockSpec((1, S, H), lambda b: (b, 0, 0)),
                 pl.BlockSpec((1, 1, S), lambda b: (b, 0, 0))]
                + [_rep_spec(w) for w in weights])
    return pl.pallas_call(
        functools.partial(attention_kernel, num_heads=num_heads),
        out_shape=jax.ShapeDtypeStruct((B, S, H), jnp.bfloat16),
        grid=(B,),
        in_specs=in_specs,
        out_specs=pl.BlockSpec((1, S, H), lambda b: (b, 0, 0)),
        compiler_params=pltpu.CompilerParams(
            dimension_semantics=("parallel",),
            vmem_limit_bytes=VMEM_LIMIT_BYTES),
    )(x, amask, *weights)


# --------------------------------- FFN block ---------------------------------

def ffn_kernel(x_ref, wi_ref, bi_ref, wo2_ref, bo2_ref, ln2g_ref, ln2b_ref,
               o_ref, acc_ref):
    k = pl.program_id(1)

    @pl.when(k == 0)
    def _():
        acc_ref[...] = jnp.zeros_like(acc_ref[...])

    x = x_ref[...]                                                        # [tr, H] bf16
    inter = _gelu(_dot_nt(x, wi_ref[...]) + bi_ref[...])                  # [tr, TI] f32
    acc_ref[...] += _dot_nt(inter.astype(jnp.bfloat16), wo2_ref[...])     # [tr, H] f32

    @pl.when(k == pl.num_programs(1) - 1)
    def _():
        ffn_out = acc_ref[...] + bo2_ref[...]
        o_ref[...] = _ln(x.astype(jnp.float32) + ffn_out,
                         ln2g_ref[...], ln2b_ref[...]).astype(jnp.bfloat16)


def bert_ffn(x, lp):
    B, S, H = x.shape
    N = B * S
    x2d = x.reshape(N, H)
    inter = lp["wi"].shape[0]
    tr = _pick_row_tile(N, cap=256)
    ti = _pick_lane_tile(inter, cap=512)       # K-tile the intermediate dim
    out = pl.pallas_call(
        ffn_kernel,
        out_shape=jax.ShapeDtypeStruct((N, H), jnp.bfloat16),
        grid=(N // tr, inter // ti),
        in_specs=[pl.BlockSpec((tr, H), lambda i, k: (i, 0)),
                  pl.BlockSpec((ti, H), lambda i, k: (k, 0)),
                  pl.BlockSpec((1, ti), lambda i, k: (0, k)),
                  pl.BlockSpec((H, ti), lambda i, k: (0, k)),
                  pl.BlockSpec((1, H), lambda i, k: (0, 0)),
                  pl.BlockSpec((1, H), lambda i, k: (0, 0)),
                  pl.BlockSpec((1, H), lambda i, k: (0, 0))],
        out_specs=pl.BlockSpec((tr, H), lambda i, k: (i, 0)),
        scratch_shapes=[pltpu.VMEM((tr, H), jnp.float32)],
        compiler_params=pltpu.CompilerParams(
            dimension_semantics=("parallel", "arbitrary"),
            vmem_limit_bytes=VMEM_LIMIT_BYTES),
    )(x2d, lp["wi"], lp["bi"], lp["wo2"], lp["bo2"], lp["ln2_g"], lp["ln2_b"])
    return out.reshape(B, S, H)


# --------------------------- classifier (vocab-tiled) ---------------------------

def classify_lse_kernel(x_ref, wc_ref, bc_ref, lse_ref, m_ref, s_ref):
    v = pl.program_id(1)

    @pl.when(v == 0)
    def _():
        m_ref[...] = jnp.full_like(m_ref[...], -jnp.inf)
        s_ref[...] = jnp.zeros_like(s_ref[...])

    logits = _dot_nt(x_ref[...], wc_ref[...]) + bc_ref[...]               # [tr, TV] f32
    m_prev = m_ref[...]
    m_new = jnp.maximum(m_prev, jnp.max(logits, axis=-1, keepdims=True))
    s_ref[...] = (s_ref[...] * jnp.exp(m_prev - m_new)
                  + jnp.sum(jnp.exp(logits - m_new), axis=-1, keepdims=True))
    m_ref[...] = m_new

    @pl.when(v == pl.num_programs(1) - 1)
    def _():
        lse_ref[...] = m_ref[...] + jnp.log(s_ref[...])


def classify_lse(x2d, wc_pad, bc_pad, v_tile):
    N, H = x2d.shape
    Vp = wc_pad.shape[0]
    tr = _pick_row_tile(N, cap=256)
    return pl.pallas_call(
        classify_lse_kernel,
        out_shape=jax.ShapeDtypeStruct((N, 1), jnp.float32),
        grid=(N // tr, Vp // v_tile),
        in_specs=[pl.BlockSpec((tr, H), lambda i, v: (i, 0)),
                  pl.BlockSpec((v_tile, H), lambda i, v: (v, 0)),
                  pl.BlockSpec((1, v_tile), lambda i, v: (0, v))],
        out_specs=pl.BlockSpec((tr, 1), lambda i, v: (i, 0)),
        scratch_shapes=[pltpu.VMEM((tr, 1), jnp.float32),
                        pltpu.VMEM((tr, 1), jnp.float32)],
        compiler_params=pltpu.CompilerParams(
            dimension_semantics=("parallel", "arbitrary"),
            vmem_limit_bytes=VMEM_LIMIT_BYTES),
    )(x2d, wc_pad, bc_pad)


def classify_probs_kernel(x_ref, wc_ref, bc_ref, lse_ref, o_ref):
    # Recomputes this vocab tile's logits (cheaper than keeping [tr, Vp] live in VMEM);
    # normalization is exact: exp(logit - lse).
    logits = _dot_nt(x_ref[...], wc_ref[...]) + bc_ref[...]
    o_ref[...] = jnp.exp(logits - lse_ref[...]).astype(o_ref.dtype)


def classify_probs(x2d, wc_pad, bc_pad, lse, v_tile):
    N, H = x2d.shape
    Vp = wc_pad.shape[0]
    tr = _pick_row_tile(N, cap=256)
    return pl.pallas_call(
        classify_probs_kernel,
        out_shape=jax.ShapeDtypeStruct((N, Vp), jnp.bfloat16),   # bf16 writeback: HBM-BW bound
        grid=(N // tr, Vp // v_tile),
        in_specs=[pl.BlockSpec((tr, H), lambda i, v: (i, 0)),
                  pl.BlockSpec((v_tile, H), lambda i, v: (v, 0)),
                  pl.BlockSpec((1, v_tile), lambda i, v: (0, v)),
                  pl.BlockSpec((tr, 1), lambda i, v: (i, 0))],
        out_specs=pl.BlockSpec((tr, v_tile), lambda i, v: (i, v)),
        compiler_params=pltpu.CompilerParams(
            dimension_semantics=("parallel", "parallel"),
            vmem_limit_bytes=VMEM_LIMIT_BYTES),
    )(x2d, wc_pad, bc_pad, lse)


def classify_loss_kernel(x_ref, wc_ref, bc_ref, y_ref, pt_ref, valid_ref,
                         m_ref, s_ref, p_ref):
    v = pl.program_id(1)

    @pl.when(v == 0)
    def _():
        m_ref[...] = jnp.full_like(m_ref[...], -jnp.inf)
        s_ref[...] = jnp.zeros_like(s_ref[...])
        p_ref[...] = jnp.zeros_like(p_ref[...])

    logits = _dot_nt(x_ref[...], wc_ref[...]) + bc_ref[...]               # [tr, TV] f32
    R, TV = logits.shape
    labels = y_ref[...]                                                   # [tr, 1] int32
    cols = v * TV + jax.lax.broadcasted_iota(jnp.int32, (R, TV), 1)
    # select-then-reduce (no f32 one-hot temporary)
    p_ref[...] += jnp.sum(jnp.where(cols == labels, logits, 0.0), axis=-1, keepdims=True)

    m_prev = m_ref[...]
    m_new = jnp.maximum(m_prev, jnp.max(logits, axis=-1, keepdims=True))
    s_ref[...] = (s_ref[...] * jnp.exp(m_prev - m_new)
                  + jnp.sum(jnp.exp(logits - m_new), axis=-1, keepdims=True))
    m_ref[...] = m_new

    @pl.when(v == pl.num_programs(1) - 1)
    def _():
        valid = (labels != -1).astype(jnp.float32)                        # [tr, 1]
        lse = m_ref[...] + jnp.log(s_ref[...])
        pt_ref[...] = (lse - p_ref[...]) * valid
        valid_ref[...] = valid


def classify_loss(x2d, wc_pad, bc_pad, y2d, v_tile):
    """Returns per-token (masked) NLL and validity; final mean done in the wrapper."""
    N, H = x2d.shape
    Vp = wc_pad.shape[0]
    tr = _pick_row_tile(N, cap=256)
    return pl.pallas_call(
        classify_loss_kernel,
        out_shape=(jax.ShapeDtypeStruct((N, 1), jnp.float32),
                   jax.ShapeDtypeStruct((N, 1), jnp.float32)),
        grid=(N // tr, Vp // v_tile),
        in_specs=[pl.BlockSpec((tr, H), lambda i, v: (i, 0)),
                  pl.BlockSpec((v_tile, H), lambda i, v: (v, 0)),
                  pl.BlockSpec((1, v_tile), lambda i, v: (0, v)),
                  pl.BlockSpec((tr, 1), lambda i, v: (i, 0))],
        out_specs=(pl.BlockSpec((tr, 1), lambda i, v: (i, 0)),
                   pl.BlockSpec((tr, 1), lambda i, v: (i, 0))),
        scratch_shapes=[pltpu.VMEM((tr, 1), jnp.float32),
                        pltpu.VMEM((tr, 1), jnp.float32),
                        pltpu.VMEM((tr, 1), jnp.float32)],
        compiler_params=pltpu.CompilerParams(
            dimension_semantics=("parallel", "arbitrary"),
            vmem_limit_bytes=VMEM_LIMIT_BYTES),
    )(x2d, wc_pad, bc_pad, y2d)


# ------------------------------- model wrapper -------------------------------

def init_params(key, hidden, vocab, inter, num_layers, max_pos, num_heads, n_types=2):
    def nrm(k, shape, std=0.02, dtype=jnp.float32):
        return (std * jax.random.normal(k, shape, jnp.float32)).astype(dtype)

    bf = jnp.bfloat16
    dH = hidden // num_heads
    # vocab padded to a multiple of the vocab tile -> lane-dense, tile-divisible classifier
    v_tile = 512 if vocab >= 512 else _round_up(vocab, 128)
    vp = _round_up(vocab, v_tile)

    keys = jax.random.split(key, 4 + num_layers)

    wc = nrm(keys[3], (vocab, hidden), dtype=bf)                   # classify: hidden -> vocab
    wc_pad = jnp.zeros((vp, hidden), bf).at[:vocab].set(wc)
    bc_pad = jnp.full((1, vp), NEG_INF, jnp.float32).at[:, :vocab].set(0.0)

    params = {
        "vocab": vocab,
        "v_tile": v_tile,
        "word_emb": nrm(keys[0], (vocab, hidden)),
        "pos_emb": nrm(keys[1], (max_pos, hidden)),
        "type_emb": nrm(keys[2], (n_types, hidden)),
        "emb_ln_g": jnp.ones((1, hidden), jnp.float32),
        "emb_ln_b": jnp.zeros((1, hidden), jnp.float32),
        "wc_pad": wc_pad,
        "bc_pad": bc_pad,
        "layers": [],
    }
    for l in range(num_layers):
        ks = jax.random.split(keys[4 + l], 6)
        wo = nrm(ks[3], (hidden, hidden), dtype=bf)
        # Output projection pre-split per head: [nh, H_out, dH] so the head merge is folded into
        # per-head MXU contractions (no [S,H] ctx scratch / masked lane stores in the kernel).
        wo3 = jnp.transpose(wo.reshape(hidden, num_heads, dH), (1, 0, 2))
        params["layers"].append({
            "wq": nrm(ks[0], (hidden, hidden), dtype=bf), "bq": jnp.zeros((1, hidden), jnp.float32),
            "wk": nrm(ks[1], (hidden, hidden), dtype=bf), "bk": jnp.zeros((1, hidden), jnp.float32),
            "wv": nrm(ks[2], (hidden, hidden), dtype=bf), "bv": jnp.zeros((1, hidden), jnp.float32),
            "wo3": wo3, "bo": jnp.zeros((1, hidden), jnp.float32),
            "ln1_g": jnp.ones((1, hidden), jnp.float32), "ln1_b": jnp.zeros((1, hidden), jnp.float32),
            "wi": nrm(ks[4], (inter, hidden), dtype=bf), "bi": jnp.zeros((1, inter), jnp.float32),
            "wo2": nrm(ks[5], (hidden, inter), dtype=bf), "bo2": jnp.zeros((1, hidden), jnp.float32),
            "ln2_g": jnp.ones((1, hidden), jnp.float32), "ln2_b": jnp.zeros((1, hidden), jnp.float32),
        })
    return params


def language_model_forward(params, x, num_heads, mask=None, y=None):
    """Mirrors LanguageModel.forward: loss if y is given, else softmax probabilities."""
    B, S = x.shape
    H = params["word_emb"].shape[1]
    V = params["vocab"]

    # Embeddings (gathers are JAX glue); LayerNorm in Pallas; activations carried in bf16.
    # TODO(synk): fuse the gather-adds into the LayerNorm kernel via scalar-prefetched ids.
    emb = (params["word_emb"][x]
           + params["pos_emb"][:S][None, :, :]
           + params["type_emb"][0][None, None, :])
    h = layernorm_bf16(emb.reshape(B * S, H),
                       params["emb_ln_g"], params["emb_ln_b"]).reshape(B, S, H)

    # Additive attention mask, broadcast over heads/queries (safe large-negative constant).
    if mask is None:
        amask = jnp.zeros((B, 1, S), jnp.float32)
    else:
        amask = (1.0 - mask.astype(jnp.float32)).reshape(B, 1, S) * (-1e9)

    # TODO(synk): cross-pallas_call weight prefetch (P10) to hide the per-layer weight DMA.
    for lp in params["layers"]:
        h = bert_attention(h, amask, lp, num_heads)
        h = bert_ffn(h, lp)

    h2d = h.reshape(B * S, H)
    if y is not None:
        y2d = y.reshape(B * S, 1).astype(jnp.int32)
        per_tok, valid = classify_loss(h2d, params["wc_pad"], params["bc_pad"], y2d,
                                       params["v_tile"])
        # CrossEntropy(ignore_index=-1) mean, guarded against all-ignored batches.
        return jnp.sum(per_tok) / jnp.maximum(jnp.sum(valid), 1.0)
    else:
        lse = classify_lse(h2d, params["wc_pad"], params["bc_pad"], params["v_tile"])
        probs = classify_probs(h2d, params["wc_pad"], params["bc_pad"], lse, params["v_tile"])
        return probs[:, :V].reshape(B, S, V)       # drop lane-padding columns


# ------------------------------------ main ------------------------------------

if __name__ == "__main__":
    B, S = 2, 8
    HIDDEN, VOCAB, HEADS, INTER, LAYERS, MAX_POS = 32, 24, 4, 64, 2, 16

    root = jax.random.PRNGKey(0)
    kp, kx, ky = jax.random.split(root, 3)
    params = init_params(kp, HIDDEN, VOCAB, INTER, LAYERS, MAX_POS, HEADS)

    x = jax.random.randint(kx, (B, S), 0, VOCAB, dtype=jnp.int32)
    y = jax.random.randint(ky, (B, S), 0, VOCAB, dtype=jnp.int32)
    y = y.at[0, :2].set(-1)                       # exercise ignore_index=-1
    mask = jnp.ones((B, S), jnp.float32)

    # Inference branch: softmax over vocab (two-pass exact normalization, bf16 output).
    probs = language_model_forward(params, x, HEADS)
    # Training branch: cross-entropy loss with ignore_index=-1.
    loss = language_model_forward(params, x, HEADS, mask=mask, y=y)

    probs, loss = jax.block_until_ready((probs, loss))

    assert probs.shape == (B, S, VOCAB)
    sums = jnp.sum(probs.astype(jnp.float32), axis=-1)
    assert bool(jnp.all(jnp.abs(sums - 1.0) < 1e-2))
    assert bool(jnp.isfinite(loss))
    print("KERNEL_OK")
</pallas_src>

<mosaic_0001>
module attributes {stable_mosaic.version = 11 : i64} {
  func.func @layernorm_kernel(%arg0: i32, %arg1: memref<16x32xf32, #tpu.memory_space<vmem>>, %arg2: memref<1x32xf32, #tpu.memory_space<vmem>>, %arg3: memref<1x32xf32, #tpu.memory_space<vmem>>, %arg4: memref<16x32xbf16, #tpu.memory_space<vmem>>) attributes {dimension_semantics = [#tpu.dimension_semantics<parallel>], iteration_bounds = array<i64: 1>, scalar_prefetch = 0 : i64, scratch_operands = 0 : i64, tpu.core_type = #tpu.core_type<tc>, window_params = [{transform_indices = @transform_0, window_bounds = array<i64: 16, 32>}, {pipeline_mode = #tpu.pipeline_mode<synchronous>, transform_indices = @transform_1, window_bounds = array<i64: 1, 32>}, {pipeline_mode = #tpu.pipeline_mode<synchronous>, transform_indices = @transform_2, window_bounds = array<i64: 1, 32>}, {transform_indices = @transform_3, window_bounds = array<i64: 16, 32>}]} {
    %c0 = arith.constant 0 : index
    %c0_0 = arith.constant 0 : index
    %0 = vector.load %arg1[%c0, %c0_0] : memref<16x32xf32, #tpu.memory_space<vmem>>, vector<16x32xf32>
    %c0_1 = arith.constant 0 : index
    %c0_2 = arith.constant 0 : index
    %1 = vector.load %arg2[%c0_1, %c0_2] : memref<1x32xf32, #tpu.memory_space<vmem>>, vector<1x32xf32>
    %c0_3 = arith.constant 0 : index
    %c0_4 = arith.constant 0 : index
    %2 = vector.load %arg3[%c0_3, %c0_4] : memref<1x32xf32, #tpu.memory_space<vmem>>, vector<1x32xf32>
    %cst = arith.constant dense<0.000000e+00> : vector<16xf32>
    %3 = vector.multi_reduction <add>, %0, %cst [1] : vector<16x32xf32> to vector<16xf32>
    %4 = vector.shape_cast %3 : vector<16xf32> to vector<16x1xf32>
    %cst_5 = arith.constant 3.200000e+01 : f32
    %5 = vector.broadcast %cst_5 : f32 to vector<16x1xf32>
    %6 = arith.divf %4, %5 : vector<16x1xf32>
    %7 = vector.broadcast %6 : vector<16x1xf32> to vector<16x32xf32>
    %8 = arith.subf %0, %7 : vector<16x32xf32>
    %9 = arith.mulf %8, %8 : vector<16x32xf32>
    %cst_6 = arith.constant dense<0.000000e+00> : vector<16xf32>
    %10 = vector.multi_reduction <add>, %9, %cst_6 [1] : vector<16x32xf32> to vector<16xf32>
    %11 = vector.shape_cast %10 : vector<16xf32> to vector<16x1xf32>
    %cst_7 = arith.constant 3.200000e+01 : f32
    %12 = vector.broadcast %cst_7 : f32 to vector<16x1xf32>
    %13 = arith.divf %11, %12 : vector<16x1xf32>
    %14 = vector.broadcast %6 : vector<16x1xf32> to vector<16x32xf32>
    %15 = arith.subf %0, %14 : vector<16x32xf32>
    %cst_8 = arith.constant 9.99999996E-13 : f32
    %16 = vector.broadcast %cst_8 : f32 to vector<16x1xf32>
    %17 = arith.addf %13, %16 : vector<16x1xf32>
    %18 = math.rsqrt %17 : vector<16x1xf32>
    %19 = vector.broadcast %18 : vector<16x1xf32> to vector<16x32xf32>
    %20 = arith.mulf %15, %19 : vector<16x32xf32>
    %21 = vector.broadcast %1 : vector<1x32xf32> to vector<16x32xf32>
    %22 = arith.mulf %20, %21 : vector<16x32xf32>
    %23 = vector.broadcast %2 : vector<1x32xf32> to vector<16x32xf32>
    %24 = arith.addf %22, %23 : vector<16x32xf32>
    %25 = arith.truncf %24 : vector<16x32xf32> to vector<16x32xbf16>
    %c0_9 = arith.constant 0 : index
    %c0_10 = arith.constant 0 : index
    %26 = vector.load %arg4[%c0_9, %c0_10] : memref<16x32xbf16, #tpu.memory_space<vmem>>, vector<16x32xbf16>
    tpu.vector_store %arg4[%c0_9, %c0_10], %25 {strides = array<i32>} : memref<16x32xbf16, #tpu.memory_space<vmem>>, vector<16x32xbf16>,
    return
  }
  func.func @transform_0(%arg0: i32) -> (i32, i32) {
    %c0_i32 = arith.constant 0 : i32
    %c0_i32_0 = arith.constant 0 : i32
    return %arg0, %c0_i32 : i32, i32
  }
  func.func @transform_1(%arg0: i32) -> (i32, i32) {
    %c0_i32 = arith.constant 0 : i32
    %c0_i32_0 = arith.constant 0 : i32
    %c0_i32_1 = arith.constant 0 : i32
    return %c0_i32, %c0_i32_0 : i32, i32
  }
  func.func @transform_2(%arg0: i32) -> (i32, i32) {
    %c0_i32 = arith.constant 0 : i32
    %c0_i32_0 = arith.constant 0 : i32
    %c0_i32_1 = arith.constant 0 : i32
    return %c0_i32, %c0_i32_0 : i32, i32
  }
  func.func @transform_3(%arg0: i32) -> (i32, i32) {
    %c0_i32 = arith.constant 0 : i32
    %c0_i32_0 = arith.constant 0 : i32
    return %arg0, %c0_i32 : i32, i32
  }
}

</mosaic_0001>

<llo_original>
// kernel: tpu_custom_call.1
$region0: #{tpu_custom_call.1}
  #allocation0 [shape = 'u32[]', space=smem, size = 0x4, offset = 0x4, fixed_abs, tag = 'smem constant byte address 0x4 - core index']
  #allocation1 [shape = 'u32[144,128]{1,0:T(1,128)}', space=vmem, size = 0x12000, scoped, tag = 'internal scratch']
  %s0 = inlined_call_operand.hbm [shape: f32[16,32], index: 0, kind: input, shape index: {}]
  %s1 = inlined_call_operand.vmem [shape: f32[1,32], index: 1, kind: input, shape index: {}]
  %s2 = inlined_call_operand.vmem [shape: f32[1,32], index: 2, kind: input, shape index: {}]
  %s3 = inlined_call_operand.hbm [shape: bf16[16,32], index: 3, kind: output, shape index: {}]
  %s4 = sld [smem:[#allocation0]]
  $region26: #{tpu_custom_call.1} parent=0
    _
  %s6 = ssub.s32 1, %s4
  %s7 = scalar_select 0, %s6, %s4
  $region1: #{tpu_custom_call.1} parent=0
    #allocation2 [shape = 'u8[8192]{0}', space=vmem, size = 0x2000, scoped, tag = 'input window, operand 0, single buffered']
    #allocation3 [shape = 's32[1]{0}', space=sflag, size = 0x4, scoped, tag = 'scoped memory for tpu_custom_call.1']
    #allocation4 [shape = 's32[1]{0}', space=sflag, size = 0x4, scoped, tag = 'scoped memory for tpu_custom_call.1']
    #allocation5 [shape = 'u8[4096]{0}', space=vmem, size = 0x1000, scoped, tag = 'output window, operand 0, single buffered']
    %8 = vsyncpa [#allocation3], 0
    %9 = vsyncpa [#allocation4], 0
    // Predicated region
    $region2: #{tpu_custom_call.1} parent=1 // pred_check
      _
    $region3: #{tpu_custom_call.1} parent=1 // pred_check_branch
      %11 = sbr.rel (0) target = $region5
    $region4: #{tpu_custom_call.1} parent=1 // pred_region
      %s13 = ssub.s32 256, 256
      %14 = vsyncadd [#allocation3], %s13
      %s15 = sshll.u32 [#allocation2], 4
      %s16 = int_to_ptr.vmem [resolvable:$true] %s15
      %21 = dma.hbm_to_vmem [thread:$0]  %s0, 256, %s16, [#allocation3], 128, 128, 8
    $region5: #{tpu_custom_call.1} parent=1 // pred_fallthru
      _
    // Predicated region
    $region6: #{tpu_custom_call.1} parent=1 // pred_check
      _
    $region7: #{tpu_custom_call.1} parent=1 // pred_check_branch
      %23 = sbr.rel (0) target = $region9
    $region8: #{tpu_custom_call.1} parent=1 // pred_region
      _
    $region9: #{tpu_custom_call.1} parent=1 // pred_fallthru
      _
    // Predicated region
    $region10: #{tpu_custom_call.1} parent=1 // pred_check
      _
    $region11: #{tpu_custom_call.1} parent=1 // pred_check_branch
      %25 = sbr.rel (0) target = $region13
    $region12: #{tpu_custom_call.1} parent=1 // pred_region
      _
    $region13: #{tpu_custom_call.1} parent=1 // pred_fallthru
      _
    // Predicated region
    $region14: #{tpu_custom_call.1} parent=1 // pred_check
      _
    $region15: #{tpu_custom_call.1} parent=1 // pred_check_branch
      %27 = sbr.rel (0) target = $region17
    $region16: #{tpu_custom_call.1} parent=1 // pred_region
      %28 = dma.done [#allocation3], 256
    $region17: #{tpu_custom_call.1} parent=1 // pred_fallthru
      _
    %v29 = vld [vmem:[#allocation2] sm:$0xff]
    %v30 = vld [vmem:[#allocation2 + $0x8] sm:$0xff]
    %v31 = vld [vmem:[%s1] sm:$0x1]
    %v32 = vld [vmem:[%s2] sm:$0x1]
    %vm33 = vcmask 261120
    %v34 = vsel %vm33, %v29, 0.0
    %35 = vadd.xlane.f32.xlu0 %v34
    %v36 = vpop.xlane.xlu0 %35
    %v37 = vsel %vm33, %v30, 0.0
    %38 = vadd.xlane.f32.xlu0 %v37
    %v39 = vpop.xlane.xlu0 %38
    %v40 = vrcp.pop 32.0
    %v41 = vmul.f32 %v36, %v40
    %v42 = vmul.f32 %v39, %v40
    %v43 = vsub.f32 %v29, %v41
    %v44 = vsub.f32 %v30, %v42
    %v45 = vmul.f32 %v43, %v43
    %v46 = vmul.f32 %v44, %v44
    %v47 = vsel %vm33, %v45, 0.0
    %48 = vadd.xlane.f32.xlu0 %v47
    %v49 = vpop.xlane.xlu0 %48
    %v50 = vsel %vm33, %v46, 0.0
    %51 = vadd.xlane.f32.xlu0 %v50
    %v52 = vpop.xlane.xlu0 %51
    %v53 = vmul.f32 %v49, %v40
    %v54 = vmul.f32 %v52, %v40
    %v55 = vadd.f32 %v53, 1e-12
    %v56 = vadd.f32 %v54, 1e-12
    %v57 = vrsqrt.pop %v55
    %v58 = vrsqrt.pop %v56
    %v59 = vmul.f32 %v43, %v57
    %v60 = vmul.f32 %v44, %v58
    %v62 = vlaneseq
    %v63 = vshrl.u32 %v62, 7
    %v64 = vsub.s32 0, %v63
    %v65 = vrot.slane %v31, %v64
    %v67 = vmul.f32 %v59, %v65
    %v68 = vmul.f32 %v60, %v65
    %v70 = vlaneseq
    %v71 = vshrl.u32 %v70, 7
    %v72 = vsub.s32 0, %v71
    %v73 = vrot.slane %v32, %v72
    %v75 = vadd.f32 %v67, %v73
    %v76 = vadd.f32 %v68, %v73
    %v77 = vpack.c.bf16 %v76, %v75
    %v79 = vunpack.c.l.b16 %v77
    %v80 = vunpack.c.h.b16 %v77
    %v81 = vpack.c.b16 %v79, %v79
    %v82 = vpack.c.b16 %v80, %v80
    %vm85 = vcmask 257024
    %86 = vst.msk [vmem:[#allocation5] sm:$0xf] %vm85, %v81
    %87 = vst.msk [vmem:[#allocation5 + $0x4] sm:$0xf] %vm85, %v82
    // Predicated region
    $region18: #{tpu_custom_call.1} parent=1 // pred_check
      _
    $region19: #{tpu_custom_call.1} parent=1 // pred_check_branch
      %89 = sbr.rel (0) target = $region21
    $region20: #{tpu_custom_call.1} parent=1 // pred_region
      %s91 = ssub.s32 128, 128
      %92 = vsyncadd [#allocation4], %s91
      %s93 = sshll.u32 [#allocation5], 4
      %s94 = int_to_ptr.vmem [resolvable:$true] %s93
      %99 = dma.vmem_to_hbm [thread:$0]  %s94, 128, %s3, [#allocation4], 64, 64, 4
    $region21: #{tpu_custom_call.1} parent=1 // pred_fallthru
      _
    // Predicated region
    $region22: #{tpu_custom_call.1} parent=1 // pred_check
      _
    $region23: #{tpu_custom_call.1} parent=1 // pred_check_branch
      %101 = sbr.rel (0) target = $region25
    $region24: #{tpu_custom_call.1} parent=1 // pred_region
      %102 = dma.done [#allocation4], 128
    $region25: #{tpu_custom_call.1} parent=1 // pred_fallthru
      _
    %103 = vsyncpa [#allocation3], 1
    %104 = vsyncpa [#allocation4], 1

</llo_original>
